<compile_context>
chip_gen: v7x
topology: tpu7x:2x2x1
jax: 0.10.0
libtpu: 0.0.40
codegen_flags: <defaults>
</compile_context>

<pallas_src>
import jax
import jax.numpy as jnp
from jax.experimental import pallas as pl
from jax.experimental.pallas import tpu as pltpu


def fm_kernel(feat_ref, w_ref, v2_ref, bias_ref, out_ref):
    # feat_ref : [TB, D]     feature tile (native dtype)
    # w_ref    : [D, F+1]    col 0 = fc weight, cols 1.. = fm_V
    # v2_ref   : [D, F]      fm_V ** 2 (precomputed)
    # bias_ref : [TB, 1]     b_users[uids] + b_items[iids] + fc_b
    # out_ref  : [TB, 1]
    x = feat_ref[...]

    # One MXU pass covers both the linear part and (x @ V).
    t = jnp.dot(x, w_ref[...], preferred_element_type=jnp.float32)   # [TB, F+1]
    lin = t[:, 0:1]                                                   # x @ fc_w
    xv = t[:, 1:]                                                     # x @ V

    # Square in f32 (safe on v5e where the VPU has no bf16 path).
    x2 = x.astype(jnp.float32)
    x2 = x2 * x2
    t2 = jnp.dot(x2, v2_ref[...], preferred_element_type=jnp.float32)  # [TB, F]

    inter = 0.5 * jnp.sum(xv * xv - t2, axis=1, keepdims=True)
    out_ref[...] = inter + lin + bias_ref[...]


def _choose_tb(B, D, itemsize):
    """Batch tile: multiple of 8, ~2 MiB feature block, capped at 1024 rows."""
    max_rows = max(8, (2 * 1024 * 1024) // max(1, D * itemsize))
    tb = min(1024, max_rows)
    tb = max(8, (tb // 8) * 8)
    b_pad8 = ((B + 7) // 8) * 8
    return min(tb, b_pad8)


def fm_forward(feature, uids, iids, params):
    """Full FM.forward: build_fm(feature) + b_users[uids] + b_items[iids]."""
    fc_w, fc_b, fm_V = params["fc_w"], params["fc_b"], params["fm_V"]
    b_users, b_items = params["b_users"], params["b_items"]

    B, D = feature.shape
    F_ = fm_V.shape[1]

    # Fold fc_w into the factor matrix: [D, F+1].
    w_cat = jnp.concatenate(
        [fc_w.astype(jnp.float32), fm_V.astype(jnp.float32)], axis=1)
    v_sq = fm_V.astype(jnp.float32) ** 2                         # [D, F]

    # Merge every per-example scalar bias into one column.
    bias = (b_users[uids] + b_items[iids]
            + jnp.reshape(fc_b, (1, 1))).astype(jnp.float32)     # [B, 1]

    # Batch tiling + padding so every grid step sees a full (TB, D) block.
    TB = _choose_tb(B, D, feature.dtype.itemsize)
    Bp = ((B + TB - 1) // TB) * TB
    if Bp != B:
        feature = jnp.pad(feature, ((0, Bp - B), (0, 0)))
        bias = jnp.pad(bias, ((0, Bp - B), (0, 0)))
    n_tiles = Bp // TB

    out = pl.pallas_call(
        fm_kernel,
        out_shape=jax.ShapeDtypeStruct((Bp, 1), jnp.float32),
        grid_spec=pltpu.PrefetchScalarGridSpec(
            num_scalar_prefetch=0,
            grid=(n_tiles,),
            in_specs=[
                pl.BlockSpec((TB, D), lambda i: (i, 0)),       # feature tile
                pl.BlockSpec((D, F_ + 1), lambda i: (0, 0)),   # [fc_w | fm_V]
                pl.BlockSpec((D, F_), lambda i: (0, 0)),       # fm_V ** 2
                pl.BlockSpec((TB, 1), lambda i: (i, 0)),       # merged bias
            ],
            out_specs=pl.BlockSpec((TB, 1), lambda i: (i, 0)),
        ),
        compiler_params=pltpu.CompilerParams(
            dimension_semantics=("parallel",)),
    )(feature, w_cat, v_sq, bias)
    return out[:B]


def init_params(key, dim, user_num, item_num, n_factors=10):
    """Deterministic init mirroring FM.init_weight()."""
    k1, k2, k3, k4 = jax.random.split(key, 4)
    fc_w = jax.random.uniform(k1, (dim, 1), jnp.float32, -0.05, 0.05)  # Linear weight (transposed)
    fc_b = jnp.zeros((1,), jnp.float32)
    fm_V = jax.random.uniform(k2, (dim, n_factors), jnp.float32, -0.05, 0.05)
    b_users = jax.random.uniform(k3, (user_num, 1), jnp.float32, 0.0, 0.1)
    b_items = jax.random.uniform(k4, (item_num, 1), jnp.float32, 0.0, 0.1)
    return dict(fc_w=fc_w, fc_b=fc_b, fm_V=fm_V, b_users=b_users, b_items=b_items)


def fm_reference(feature, uids, iids, params):
    """Plain-JAX reference matching the PyTorch forward exactly."""
    x = feature.astype(jnp.float32)
    lin = x @ params["fc_w"] + params["fc_b"]
    t1 = (x @ params["fm_V"]) ** 2
    t2 = (x ** 2) @ (params["fm_V"] ** 2)
    fm_out = 0.5 * jnp.sum(t1 - t2, axis=1, keepdims=True) + lin
    return fm_out + params["b_users"][uids] + params["b_items"][iids]


if __name__ == "__main__":
    B, DIM, USER_NUM, ITEM_NUM = 8, 32, 16, 16

    key = jax.random.PRNGKey(0)
    kp, kf, ku, ki = jax.random.split(key, 4)

    params = init_params(kp, DIM, USER_NUM, ITEM_NUM)
    feature = jax.random.normal(kf, (B, DIM), jnp.float32)
    uids = jax.random.randint(ku, (B,), 0, USER_NUM)
    iids = jax.random.randint(ki, (B,), 0, ITEM_NUM)

    out = fm_forward(feature, uids, iids, params)
    out = jax.block_until_ready(out)

    ref = fm_reference(feature, uids, iids, params)
    assert out.shape == (B, 1), out.shape
    assert jnp.allclose(out, ref, atol=1e-5, rtol=1e-5), (out, ref)

    print("KERNEL_OK")
</pallas_src>

<mosaic_0001>
module attributes {stable_mosaic.version = 11 : i64} {
  func.func @fm_kernel(%arg0: i32, %arg1: memref<8x32xf32, #tpu.memory_space<vmem>>, %arg2: memref<32x11xf32, #tpu.memory_space<vmem>>, %arg3: memref<32x10xf32, #tpu.memory_space<vmem>>, %arg4: memref<8x1xf32, #tpu.memory_space<vmem>>, %arg5: memref<8x1xf32, #tpu.memory_space<vmem>>) attributes {dimension_semantics = [#tpu.dimension_semantics<parallel>], iteration_bounds = array<i64: 1>, scalar_prefetch = 0 : i64, scratch_operands = 0 : i64, tpu.core_type = #tpu.core_type<tc>, window_params = [{transform_indices = @transform_0, window_bounds = array<i64: 8, 32>}, {pipeline_mode = #tpu.pipeline_mode<synchronous>, transform_indices = @transform_1, window_bounds = array<i64: 32, 11>}, {pipeline_mode = #tpu.pipeline_mode<synchronous>, transform_indices = @transform_2, window_bounds = array<i64: 32, 10>}, {transform_indices = @transform_3, window_bounds = array<i64: 8, 1>}, {transform_indices = @transform_4, window_bounds = array<i64: 8, 1>}]} {
    %c0 = arith.constant 0 : index
    %c0_0 = arith.constant 0 : index
    %0 = vector.load %arg1[%c0, %c0_0] : memref<8x32xf32, #tpu.memory_space<vmem>>, vector<8x32xf32>
    %c0_1 = arith.constant 0 : index
    %c0_2 = arith.constant 0 : index
    %1 = vector.load %arg2[%c0_1, %c0_2] : memref<32x11xf32, #tpu.memory_space<vmem>>, vector<32x11xf32>
    %cst = arith.constant dense<0.000000e+00> : vector<8x11xf32>
    %2 = tpu.matmul %0, %1, %cst {dimension_numbers = #tpu.dot_dimension_numbers<[1], [0], [0], [1], [0, 0, 1, 1], [], []>} : vector<8x32xf32>, vector<32x11xf32>, vector<8x11xf32> -> vector<8x11xf32>
    %3 = vector.extract_strided_slice %2 {offsets = [0, 0], sizes = [8, 1], strides = [1, 1]} : vector<8x11xf32> to vector<8x1xf32>
    %4 = vector.extract_strided_slice %2 {offsets = [0, 1], sizes = [8, 10], strides = [1, 1]} : vector<8x11xf32> to vector<8x10xf32>
    %5 = arith.mulf %0, %0 : vector<8x32xf32>
    %c0_3 = arith.constant 0 : index
    %c0_4 = arith.constant 0 : index
    %6 = vector.load %arg3[%c0_3, %c0_4] : memref<32x10xf32, #tpu.memory_space<vmem>>, vector<32x10xf32>
    %cst_5 = arith.constant dense<0.000000e+00> : vector<8x10xf32>
    %7 = tpu.matmul %5, %6, %cst_5 {dimension_numbers = #tpu.dot_dimension_numbers<[1], [0], [0], [1], [0, 0, 1, 1], [], []>} : vector<8x32xf32>, vector<32x10xf32>, vector<8x10xf32> -> vector<8x10xf32>
    %8 = arith.mulf %4, %4 : vector<8x10xf32>
    %9 = arith.subf %8, %7 : vector<8x10xf32>
    %cst_6 = arith.constant dense<0.000000e+00> : vector<8xf32>
    %10 = vector.multi_reduction <add>, %9, %cst_6 [1] : vector<8x10xf32> to vector<8xf32>
    %11 = vector.shape_cast %10 : vector<8xf32> to vector<8x1xf32>
    %cst_7 = arith.constant 5.000000e-01 : f32
    %12 = vector.broadcast %cst_7 : f32 to vector<8x1xf32>
    %13 = arith.mulf %12, %11 : vector<8x1xf32>
    %14 = arith.addf %13, %3 : vector<8x1xf32>
    %c0_8 = arith.constant 0 : index
    %c0_9 = arith.constant 0 : index
    %15 = vector.load %arg4[%c0_8, %c0_9] : memref<8x1xf32, #tpu.memory_space<vmem>>, vector<8x1xf32>
    %16 = arith.addf %14, %15 : vector<8x1xf32>
    %c0_10 = arith.constant 0 : index
    %c0_11 = arith.constant 0 : index
    %17 = vector.load %arg5[%c0_10, %c0_11] : memref<8x1xf32, #tpu.memory_space<vmem>>, vector<8x1xf32>
    tpu.vector_store %arg5[%c0_10, %c0_11], %16 {strides = array<i32>} : memref<8x1xf32, #tpu.memory_space<vmem>>, vector<8x1xf32>,
    return
  }
  func.func @transform_0(%arg0: i32) -> (i32, i32) {
    %c0_i32 = arith.constant 0 : i32
    %c0_i32_0 = arith.constant 0 : i32
    return %arg0, %c0_i32 : i32, i32
  }
  func.func @transform_1(%arg0: i32) -> (i32, i32) {
    %c0_i32 = arith.constant 0 : i32
    %c0_i32_0 = arith.constant 0 : i32
    %c0_i32_1 = arith.constant 0 : i32
    return %c0_i32, %c0_i32_0 : i32, i32
  }
  func.func @transform_2(%arg0: i32) -> (i32, i32) {
    %c0_i32 = arith.constant 0 : i32
    %c0_i32_0 = arith.constant 0 : i32
    %c0_i32_1 = arith.constant 0 : i32
    return %c0_i32, %c0_i32_0 : i32, i32
  }
  func.func @transform_3(%arg0: i32) -> (i32, i32) {
    %c0_i32 = arith.constant 0 : i32
    %c0_i32_0 = arith.constant 0 : i32
    return %arg0, %c0_i32 : i32, i32
  }
  func.func @transform_4(%arg0: i32) -> (i32, i32) {
    %c0_i32 = arith.constant 0 : i32
    %c0_i32_0 = arith.constant 0 : i32
    return %arg0, %c0_i32 : i32, i32
  }
}

</mosaic_0001>

<llo_original>
// kernel: tpu_custom_call.1
$region0: #{tpu_custom_call.1}
  #allocation0 [shape = 'u32[]', space=smem, size = 0x4, offset = 0x4, fixed_abs, tag = 'smem constant byte address 0x4 - core index']
  #allocation1 [shape = 'u32[144,128]{1,0:T(1,128)}', space=vmem, size = 0x12000, scoped, tag = 'internal scratch']
  %s0 = inlined_call_operand.vmem [shape: f32[8,32], index: 0, kind: input, shape index: {}]
  %s1 = inlined_call_operand.vmem [shape: f32[32,11], index: 1, kind: input, shape index: {}]
  %s2 = inlined_call_operand.vmem [shape: f32[32,10], index: 2, kind: input, shape index: {}]
  %s3 = inlined_call_operand.vmem [shape: f32[8,1], index: 3, kind: input, shape index: {}]
  %s4 = inlined_call_operand.vmem [shape: f32[8,1], index: 4, kind: output, shape index: {}]
  %s5 = sld [smem:[#allocation0]]
  $region26: #{tpu_custom_call.1} parent=0
    _
  %s7 = ssub.s32 1, %s5
  %s8 = scalar_select 0, %s7, %s5
  // Predicated region
  $region2: #{tpu_custom_call.1} parent=0 // pred_check
    _
  $region3: #{tpu_custom_call.1} parent=0 // pred_check_branch
    %10 = sbr.rel (0) target = $region5
  $region4: #{tpu_custom_call.1} parent=0 // pred_region
    _
  $region5: #{tpu_custom_call.1} parent=0 // pred_fallthru
    _
  // Predicated region
  $region6: #{tpu_custom_call.1} parent=0 // pred_check
    _
  $region7: #{tpu_custom_call.1} parent=0 // pred_check_branch
    %12 = sbr.rel (0) target = $region9
  $region8: #{tpu_custom_call.1} parent=0 // pred_region
    _
  $region9: #{tpu_custom_call.1} parent=0 // pred_fallthru
    _
  // Predicated region
  $region10: #{tpu_custom_call.1} parent=0 // pred_check
    _
  $region11: #{tpu_custom_call.1} parent=0 // pred_check_branch
    %14 = sbr.rel (0) target = $region13
  $region12: #{tpu_custom_call.1} parent=0 // pred_region
    _
  $region13: #{tpu_custom_call.1} parent=0 // pred_fallthru
    _
  // Predicated region
  $region14: #{tpu_custom_call.1} parent=0 // pred_check
    _
  $region15: #{tpu_custom_call.1} parent=0 // pred_check_branch
    %16 = sbr.rel (0) target = $region17
  $region16: #{tpu_custom_call.1} parent=0 // pred_region
    _
  $region17: #{tpu_custom_call.1} parent=0 // pred_fallthru
    _
  %v17 = vld [vmem:[%s0] sm:$0xff]
  %v18 = vld [vmem:[%s1] sm:$0xff]
  %v19 = vld [vmem:[%s1 + $0x8] sm:$0xff]
  %v20 = vld [vmem:[%s1 + $0x10] sm:$0xff]
  %v21 = vld [vmem:[%s1 + $0x18] sm:$0xff]
  %vm22 = vcmask 261120
  %v24 = vsel %vm22, %v17, 0
  %26 = vmatprep.subr.mxu0 0.0
  %27 = vmatpush1.msra.mxu0 %v18
  %28 = vmatprep.subr.mxu0 0.0
  %29 = vmatpush1.msra.mxu0 %v19
  %30 = vmatprep.subr.mxu0 0.0
  %31 = vmatpush1.msra.mxu0 %v20
  %32 = vmatprep.subr.mxu0 0.0
  %33 = vmatpush1.msra.mxu0 %v21
  %34 = vmatprep.subr.mxu0 0.0
  %35 = vmatpush1.msra.mxu0 0.0
  %36 = vmatprep.subr.mxu0 0.0
  %37 = vmatpush1.msra.mxu0 0.0
  %38 = vmatprep.subr.mxu0 0.0
  %39 = vmatpush1.msra.mxu0 0.0
  %40 = vmatprep.subr.mxu0 0.0
  %41 = vmatpush1.msra.mxu0 0.0
  %42 = vmatprep.subr.mxu0 0.0
  %43 = vmatpush1.msra.mxu0 0.0
  %44 = vmatprep.subr.mxu0 0.0
  %45 = vmatpush1.msra.mxu0 0.0
  %46 = vmatprep.subr.mxu0 0.0
  %47 = vmatpush1.msra.mxu0 0.0
  %48 = vmatprep.subr.mxu0 0.0
  %49 = vmatpush1.msra.mxu0 0.0
  %50 = vmatprep.subr.mxu0 0.0
  %51 = vmatpush1.msra.mxu0 0.0
  %52 = vmatprep.subr.mxu0 0.0
  %53 = vmatpush1.msra.mxu0 0.0
  %54 = vmatprep.subr.mxu0 0.0
  %55 = vmatpush1.msra.mxu0 0.0
  %56 = vmatprep.subr.mxu0 0.0
  %57 = vmatpush1.msra.mxu0 0.0
  %58 = vmatprep.subr.mxu0 0.0
  %59 = vmatpush1.msra.mxu0 0.0
  %60 = vmatprep.subr.mxu0 0.0
  %61 = vmatpush1.msra.mxu0 0.0
  %62 = vmatprep.subr.mxu0 0.0
  %63 = vmatpush1.msra.mxu0 0.0
  %64 = vmatprep.subr.mxu0 0.0
  %65 = vmatpush1.msra.mxu0 0.0
  %66 = vmatprep.subr.mxu0 0.0
  %67 = vmatpush1.msra.mxu0 0.0
  %68 = vmatprep.subr.mxu0 0.0
  %69 = vmatpush1.msra.mxu0 0.0
  %70 = vmatprep.subr.mxu0 0.0
  %71 = vmatpush1.msra.mxu0 0.0
  %72 = vmatprep.subr.mxu0 0.0
  %73 = vmatpush1.msra.mxu0 0.0
  %74 = vmatprep.subr.mxu0 0.0
  %75 = vmatpush1.msra.mxu0 0.0
  %76 = vmatprep.subr.mxu0 0.0
  %77 = vmatpush1.msra.mxu0 0.0
  %78 = vmatprep.subr.mxu0 0.0
  %79 = vmatpush1.msra.mxu0 0.0
  %80 = vmatprep.subr.mxu0 0.0
  %81 = vmatpush1.msra.mxu0 0.0
  %82 = vmatprep.subr.mxu0 0.0
  %83 = vmatpush1.msra.mxu0 0.0
  %84 = vmatprep.subr.mxu0 0.0
  %85 = vmatpush1.msra.mxu0 0.0
  %86 = vmatprep.subr.mxu0 0.0
  %87 = vmatpush1.msra.mxu0 0.0
  %88 = vmatprep.subr.mxu0 0.0
  %89 = vmatpush1.msra.mxu0 0.0
  %90 = vmatprep.mubr.f32.mxu0 0.0
  %91 = vmatmul.mubr.f32.gmra.mrb[0].mxu0 %v24
  %v92 = vpop.f32.mrb[0].mxu0
  %v93 = vadd.f32 0.0, %v92
  %v94 = vpop.f32.mrb[0].mxu0
  %95 = vdwg.mxu0
  %v96 = vmul.f32 %v17, %v17
  %v97 = vld [vmem:[%s2] sm:$0xff]
  %v98 = vld [vmem:[%s2 + $0x8] sm:$0xff]
  %v99 = vld [vmem:[%s2 + $0x10] sm:$0xff]
  %v100 = vld [vmem:[%s2 + $0x18] sm:$0xff]
  %v102 = vsel %vm22, %v96, 0
  %104 = vmatprep.subr.mxu0 0.0
  %105 = vmatpush1.msra.mxu0 %v97
  %106 = vmatprep.subr.mxu0 0.0
  %107 = vmatpush1.msra.mxu0 %v98
  %108 = vmatprep.subr.mxu0 0.0
  %109 = vmatpush1.msra.mxu0 %v99
  %110 = vmatprep.subr.mxu0 0.0
  %111 = vmatpush1.msra.mxu0 %v100
  %112 = vmatprep.subr.mxu0 0.0
  %113 = vmatpush1.msra.mxu0 0.0
  %114 = vmatprep.subr.mxu0 0.0
  %115 = vmatpush1.msra.mxu0 0.0
  %116 = vmatprep.subr.mxu0 0.0
  %117 = vmatpush1.msra.mxu0 0.0
  %118 = vmatprep.subr.mxu0 0.0
  %119 = vmatpush1.msra.mxu0 0.0
  %120 = vmatprep.subr.mxu0 0.0
  %121 = vmatpush1.msra.mxu0 0.0
  %122 = vmatprep.subr.mxu0 0.0
  %123 = vmatpush1.msra.mxu0 0.0
  %124 = vmatprep.subr.mxu0 0.0
  %125 = vmatpush1.msra.mxu0 0.0
  %126 = vmatprep.subr.mxu0 0.0
  %127 = vmatpush1.msra.mxu0 0.0
  %128 = vmatprep.subr.mxu0 0.0
  %129 = vmatpush1.msra.mxu0 0.0
  %130 = vmatprep.subr.mxu0 0.0
  %131 = vmatpush1.msra.mxu0 0.0
  %132 = vmatprep.subr.mxu0 0.0
  %133 = vmatpush1.msra.mxu0 0.0
  %134 = vmatprep.subr.mxu0 0.0
  %135 = vmatpush1.msra.mxu0 0.0
  %136 = vmatprep.subr.mxu0 0.0
  %137 = vmatpush1.msra.mxu0 0.0
  %138 = vmatprep.subr.mxu0 0.0
  %139 = vmatpush1.msra.mxu0 0.0
  %140 = vmatprep.subr.mxu0 0.0
  %141 = vmatpush1.msra.mxu0 0.0
  %142 = vmatprep.subr.mxu0 0.0
  %143 = vmatpush1.msra.mxu0 0.0
  %144 = vmatprep.subr.mxu0 0.0
  %145 = vmatpush1.msra.mxu0 0.0
  %146 = vmatprep.subr.mxu0 0.0
  %147 = vmatpush1.msra.mxu0 0.0
  %148 = vmatprep.subr.mxu0 0.0
  %149 = vmatpush1.msra.mxu0 0.0
  %150 = vmatprep.subr.mxu0 0.0
  %151 = vmatpush1.msra.mxu0 0.0
  %152 = vmatprep.subr.mxu0 0.0
  %153 = vmatpush1.msra.mxu0 0.0
  %154 = vmatprep.subr.mxu0 0.0
  %155 = vmatpush1.msra.mxu0 0.0
  %156 = vmatprep.subr.mxu0 0.0
  %157 = vmatpush1.msra.mxu0 0.0
  %158 = vmatprep.subr.mxu0 0.0
  %159 = vmatpush1.msra.mxu0 0.0
  %160 = vmatprep.subr.mxu0 0.0
  %161 = vmatpush1.msra.mxu0 0.0
  %162 = vmatprep.subr.mxu0 0.0
  %163 = vmatpush1.msra.mxu0 0.0
  %164 = vmatprep.subr.mxu0 0.0
  %165 = vmatpush1.msra.mxu0 0.0
  %166 = vmatprep.subr.mxu0 0.0
  %167 = vmatpush1.msra.mxu0 0.0
  %168 = vmatprep.mubr.f32.mxu0 0.0
  %169 = vmatmul.mubr.f32.gmra.mrb[0].mxu0 %v102
  %v170 = vpop.f32.mrb[0].mxu0
  %v171 = vadd.f32 0.0, %v170
  %v172 = vpop.f32.mrb[0].mxu0
  %173 = vdwg.mxu0
  %v174 = vmul.f32 %v93, %v93
  %176 = vrot.lane.b32.xlu0 %v171, 1
  %v177 = vpop.permute.xlu0 %176
  %v179 = vsub.f32 %v174, %v177
  %181 = vrot.lane.b32.xlu0 %v179, 127
  %v182 = vpop.permute.xlu0 %181
  %vm184 = vcmask 80896
  %v185 = vsel %vm184, %v182, 0.0
  %186 = vadd.xlane.f32.xlu0 %v185
  %v187 = vpop.xlane.xlu0 %186
  %v188 = vmul.f32 %v187, 0.5
  %v189 = vadd.f32 %v188, %v93
  %v190 = vld [vmem:[%s3] sm:$0xff]
  %v191 = vadd.f32 %v189, %v190
  %vm192 = vcmask 7168
  %193 = vst.msk [vmem:[%s4] sm:$0xff] %vm192, %v191
  // Predicated region
  $region18: #{tpu_custom_call.1} parent=0 // pred_check
    _
  $region19: #{tpu_custom_call.1} parent=0 // pred_check_branch
    %195 = sbr.rel (0) target = $region21
  $region20: #{tpu_custom_call.1} parent=0 // pred_region
    _
  $region21: #{tpu_custom_call.1} parent=0 // pred_fallthru
    _
  // Predicated region
  $region22: #{tpu_custom_call.1} parent=0 // pred_check
    _
  $region23: #{tpu_custom_call.1} parent=0 // pred_check_branch
    %197 = sbr.rel (0) target = $region25
  $region24: #{tpu_custom_call.1} parent=0 // pred_region
    _
  $region25: #{tpu_custom_call.1} parent=0 // pred_fallthru
    _

</llo_original>
